<compile_context>
chip_gen: v7x
topology: tpu7x:2x2x1
jax: 0.10.0
libtpu: 0.0.40
codegen_flags: <defaults>
</compile_context>

<pallas_src>
import functools

import jax
import jax.numpy as jnp
from jax import lax
from jax.experimental import pallas as pl
from jax.experimental.pallas import tpu as pltpu

_LANE = 128


def _gcn_kernel(a_ref, x_ref, w_ref, o_ref, *, mxu_dtype):
    # a_ref: (B, N, N) f32, x_ref: (B, N, Fin) f32,
    # w_ref: (Fin, Fout_pad) in mxu_dtype, o_ref: (B, N, Fout_pad) f32.
    a = a_ref[...]                                    # (B, N, N)
    x = x_ref[...]                                    # (B, N, Fin)
    w = w_ref[...]                                    # (Fin, Fout_pad), already mxu_dtype

    # deg(A + I) = rowsum(A) + 1 — no identity matrix materialized.
    deg = jnp.sum(a, axis=-1, keepdims=True) + 1.0    # (B, N, 1)  XLU reduction
    inv_sqrt = lax.rsqrt(deg)                         # (B, N, 1)  EUP rsqrt

    # Fold D^-1/2 into X:  A_norm @ X = D^-1/2 (A @ (D^-1/2 X) + D^-1/2 X)
    xs = inv_sqrt * x                                 # (B, N, Fin) f32
    ax = jnp.einsum(
        "bij,bjf->bif",
        a.astype(mxu_dtype), xs.astype(mxu_dtype),
        preferred_element_type=jnp.float32,
    ) + xs                                            # (B, N, Fin), f32 accumulate
    y = inv_sqrt * ax                                 # (B, N, Fin)

    # Second matmul: (B, N, Fin) @ (Fin, Fout_pad).  Fout >= Fin, so chaining
    # (A_norm @ X) @ W is the FLOP-minimal order.
    out = jnp.einsum(
        "bif,fo->bio",
        y.astype(mxu_dtype), w,
        preferred_element_type=jnp.float32,
    )                                                 # (B, N, Fout_pad)
    o_ref[...] = out.astype(o_ref.dtype)


def gcn_layer(X, A, W, *, mxu_dtype=jnp.bfloat16):
    """X: (B, N, Fin) f32, A: (B, N, N) f32 (non-negative), W: (Fin, Fout) f32
    -> (B, N, Fout) f32.  mxu_dtype controls the MXU operand precision
    (accumulation is always f32); A's 0/1 entries are exact in bf16."""
    B, N, Fin = X.shape
    Fin_w, Fout = W.shape
    assert Fin_w == Fin

    # Lane-dense output: pad Fout up to a multiple of 128 so the output store
    # is a full-lane unmasked vst (zero-padded W columns keep the first Fout
    # output columns bit-identical).  W is a static parameter, so pad + cast
    # to the MXU dtype here, outside the hot loop.
    Fout_pad = ((Fout + _LANE - 1) // _LANE) * _LANE
    W_p = W if Fout_pad == Fout else jnp.pad(W, ((0, 0), (0, Fout_pad - Fout)))
    W_p = W_p.astype(mxu_dtype)

    kernel = functools.partial(_gcn_kernel, mxu_dtype=mxu_dtype)
    out_p = pl.pallas_call(
        kernel,
        out_shape=jax.ShapeDtypeStruct((B, N, Fout_pad), X.dtype),
        grid_spec=pltpu.PrefetchScalarGridSpec(
            num_scalar_prefetch=0,
            grid=(1,),  # single step: whole batch per invocation (tiny shapes)
            in_specs=[
                pl.BlockSpec((B, N, N), lambda i: (0, 0, 0)),
                pl.BlockSpec((B, N, Fin), lambda i: (0, 0, 0)),
                pl.BlockSpec((Fin, Fout_pad), lambda i: (0, 0)),
            ],
            out_specs=pl.BlockSpec((B, N, Fout_pad), lambda i: (0, 0, 0)),
        ),
        compiler_params=pltpu.CompilerParams(
            dimension_semantics=("arbitrary",)),
    )(A, X, W_p)

    return out_p if Fout_pad == Fout else out_p[..., :Fout]


def gcn_layer_ref(X, A, W):
    """Pure-JAX reference mirroring the PyTorch forward exactly."""
    B, N, _ = X.shape
    I = jnp.broadcast_to(jnp.eye(N, dtype=A.dtype), (B, N, N))
    A_hat = A + I
    deg = jnp.sum(A_hat, axis=-1)                     # (B, N)
    D_inv_sqrt = jnp.einsum("bi,ij->bij",
                            1.0 / jnp.sqrt(deg), jnp.eye(N, dtype=A.dtype))
    A_norm = jnp.einsum("bij,bjk,bkl->bil", D_inv_sqrt, A_hat, D_inv_sqrt)
    out = jnp.einsum("bij,bjk->bik", A_norm, X)
    return jnp.einsum("bik,kf->bif", out, W)


if __name__ == "__main__":
    # Module hyperparameters (small shapes, consistent with the forward).
    batch = 2
    num_nodes = 16
    in_features = 16
    out_features = 32

    key = jax.random.PRNGKey(0)
    k_w, k_x, k_a = jax.random.split(key, 3)

    # Parameter: weight ~ randn(in_features, out_features), deterministic.
    W = jax.random.normal(k_w, (in_features, out_features), dtype=jnp.float32)

    # Inputs: node features X (B, N, Fin); adjacency A (B, N, N), symmetric and
    # non-negative so the inverse-sqrt degree is well-defined (same assumption
    # as the PyTorch reference — negative weights would NaN there too).
    X = jax.random.normal(k_x, (batch, num_nodes, in_features), dtype=jnp.float32)
    A_raw = jax.random.bernoulli(
        k_a, p=0.4, shape=(batch, num_nodes, num_nodes)).astype(jnp.float32)
    A = jnp.maximum(A_raw, jnp.swapaxes(A_raw, -1, -2))  # symmetric 0/1 adjacency

    ref = gcn_layer_ref(X, A, W)

    # Default bf16 MXU path (A exact at 0/1, f32 accumulate): looser tolerance
    # because X/W are rounded to bf16 before the MXU.
    out = jax.block_until_ready(gcn_layer(X, A, W))
    assert out.shape == (batch, num_nodes, out_features)
    assert jnp.allclose(out, ref, atol=5e-2, rtol=5e-2), "bf16 mismatch vs reference"

    # f32 MXU path: tight tolerance vs. reference.
    out_f32 = jax.block_until_ready(gcn_layer(X, A, W, mxu_dtype=jnp.float32))
    assert out_f32.shape == (batch, num_nodes, out_features)
    assert jnp.allclose(out_f32, ref, atol=1e-4, rtol=1e-4), "f32 mismatch vs reference"

    print("KERNEL_OK")
</pallas_src>

<mosaic_0001>
module attributes {stable_mosaic.version = 11 : i64} {
  func.func @_gcn_kernel(%arg0: i32, %arg1: memref<2x16x16xf32, #tpu.memory_space<vmem>>, %arg2: memref<2x16x16xf32, #tpu.memory_space<vmem>>, %arg3: memref<16x128xbf16, #tpu.memory_space<vmem>>, %arg4: memref<2x16x128xf32, #tpu.memory_space<vmem>>) attributes {dimension_semantics = [#tpu.dimension_semantics<arbitrary>], iteration_bounds = array<i64: 1>, scalar_prefetch = 0 : i64, scratch_operands = 0 : i64, tpu.core_type = #tpu.core_type<tc>, window_params = [{pipeline_mode = #tpu.pipeline_mode<synchronous>, transform_indices = @transform_0, window_bounds = array<i64: 2, 16, 16>}, {pipeline_mode = #tpu.pipeline_mode<synchronous>, transform_indices = @transform_1, window_bounds = array<i64: 2, 16, 16>}, {pipeline_mode = #tpu.pipeline_mode<synchronous>, transform_indices = @transform_2, window_bounds = array<i64: 16, 128>}, {pipeline_mode = #tpu.pipeline_mode<synchronous>, transform_indices = @transform_3, window_bounds = array<i64: 2, 16, 128>}]} {
    %c0 = arith.constant 0 : index
    %c0_0 = arith.constant 0 : index
    %c0_1 = arith.constant 0 : index
    %0 = vector.load %arg1[%c0, %c0_0, %c0_1] : memref<2x16x16xf32, #tpu.memory_space<vmem>>, vector<2x16x16xf32>
    %c0_2 = arith.constant 0 : index
    %c0_3 = arith.constant 0 : index
    %c0_4 = arith.constant 0 : index
    %1 = vector.load %arg2[%c0_2, %c0_3, %c0_4] : memref<2x16x16xf32, #tpu.memory_space<vmem>>, vector<2x16x16xf32>
    %c0_5 = arith.constant 0 : index
    %c0_6 = arith.constant 0 : index
    %2 = vector.load %arg3[%c0_5, %c0_6] : memref<16x128xbf16, #tpu.memory_space<vmem>>, vector<16x128xbf16>
    %cst = arith.constant dense<0.000000e+00> : vector<2x16xf32>
    %3 = vector.multi_reduction <add>, %0, %cst [2] : vector<2x16x16xf32> to vector<2x16xf32>
    %4 = vector.shape_cast %3 : vector<2x16xf32> to vector<2x16x1xf32>
    %cst_7 = arith.constant 1.000000e+00 : f32
    %5 = vector.broadcast %cst_7 : f32 to vector<2x16x1xf32>
    %6 = arith.addf %4, %5 : vector<2x16x1xf32>
    %7 = math.rsqrt %6 : vector<2x16x1xf32>
    %8 = vector.broadcast %7 : vector<2x16x1xf32> to vector<2x16x16xf32>
    %9 = arith.mulf %8, %1 : vector<2x16x16xf32>
    %10 = arith.truncf %0 : vector<2x16x16xf32> to vector<2x16x16xbf16>
    %11 = arith.truncf %9 : vector<2x16x16xf32> to vector<2x16x16xbf16>
    "tpu.trace_start"() <{level = 10 : i32, message = "bij,bjf->bif"}> : () -> ()
    %cst_8 = arith.constant dense<0.000000e+00> : vector<2x16x16xf32>
    %12 = tpu.matmul %10, %11, %cst_8 {dimension_numbers = #tpu.dot_dimension_numbers<[2], [1], [1], [2], [0, 0, 0, 1, 1, 2], [0], [0]>} : vector<2x16x16xbf16>, vector<2x16x16xbf16>, vector<2x16x16xf32> -> vector<2x16x16xf32>
    "tpu.trace_stop"() : () -> ()
    %13 = arith.addf %12, %9 : vector<2x16x16xf32>
    %14 = vector.broadcast %7 : vector<2x16x1xf32> to vector<2x16x16xf32>
    %15 = arith.mulf %14, %13 : vector<2x16x16xf32>
    %16 = arith.truncf %15 : vector<2x16x16xf32> to vector<2x16x16xbf16>
    "tpu.trace_start"() <{level = 10 : i32, message = "bif,fo->bio"}> : () -> ()
    %cst_9 = arith.constant dense<0.000000e+00> : vector<2x16x128xf32>
    %17 = tpu.matmul %16, %2, %cst_9 {dimension_numbers = #tpu.dot_dimension_numbers<[2], [0], [0, 1], [1], [0, 0, 0, 1, 1, 1], [], []>} : vector<2x16x16xbf16>, vector<16x128xbf16>, vector<2x16x128xf32> -> vector<2x16x128xf32>
    "tpu.trace_stop"() : () -> ()
    %c0_10 = arith.constant 0 : index
    %c0_11 = arith.constant 0 : index
    %c0_12 = arith.constant 0 : index
    %18 = vector.load %arg4[%c0_10, %c0_11, %c0_12] : memref<2x16x128xf32, #tpu.memory_space<vmem>>, vector<2x16x128xf32>
    tpu.vector_store %arg4[%c0_10, %c0_11, %c0_12], %17 {strides = array<i32>} : memref<2x16x128xf32, #tpu.memory_space<vmem>>, vector<2x16x128xf32>,
    return
  }
  func.func @transform_0(%arg0: i32) -> (i32, i32, i32) {
    %c0_i32 = arith.constant 0 : i32
    %c0_i32_0 = arith.constant 0 : i32
    %c0_i32_1 = arith.constant 0 : i32
    %c0_i32_2 = arith.constant 0 : i32
    return %c0_i32, %c0_i32_0, %c0_i32_1 : i32, i32, i32
  }
  func.func @transform_1(%arg0: i32) -> (i32, i32, i32) {
    %c0_i32 = arith.constant 0 : i32
    %c0_i32_0 = arith.constant 0 : i32
    %c0_i32_1 = arith.constant 0 : i32
    %c0_i32_2 = arith.constant 0 : i32
    return %c0_i32, %c0_i32_0, %c0_i32_1 : i32, i32, i32
  }
  func.func @transform_2(%arg0: i32) -> (i32, i32) {
    %c0_i32 = arith.constant 0 : i32
    %c0_i32_0 = arith.constant 0 : i32
    %c0_i32_1 = arith.constant 0 : i32
    return %c0_i32, %c0_i32_0 : i32, i32
  }
  func.func @transform_3(%arg0: i32) -> (i32, i32, i32) {
    %c0_i32 = arith.constant 0 : i32
    %c0_i32_0 = arith.constant 0 : i32
    %c0_i32_1 = arith.constant 0 : i32
    %c0_i32_2 = arith.constant 0 : i32
    return %c0_i32, %c0_i32_0, %c0_i32_1 : i32, i32, i32
  }
}

</mosaic_0001>

<llo_original>
// kernel: tpu_custom_call.1
$region0: #{tpu_custom_call.1}
  #allocation0 [shape = 'u32[]', space=smem, size = 0x4, offset = 0x4, fixed_abs, tag = 'smem constant byte address 0x4 - core index']
  #allocation1 [shape = 'u32[144,128]{1,0:T(1,128)}', space=vmem, size = 0x12000, scoped, tag = 'internal scratch']
  %s0 = inlined_call_operand.hbm [shape: f32[2,16,16], index: 0, kind: input, shape index: {}]
  %s1 = inlined_call_operand.hbm [shape: f32[2,16,16], index: 1, kind: input, shape index: {}]
  %s2 = inlined_call_operand.hbm [shape: bf16[16,128], index: 2, kind: input, shape index: {}]
  %s3 = inlined_call_operand.hbm [shape: f32[2,16,128], index: 3, kind: output, shape index: {}]
  %s4 = sld [smem:[#allocation0]]
  $region34: #{tpu_custom_call.1} parent=0
    _
  %s6 = ssub.s32 1, %s4
  %s7 = scalar_select 0, %s6, %s4
  $region1: #{tpu_custom_call.1} parent=0
    #allocation2 [shape = 'u8[16384]{0}', space=vmem, size = 0x4000, scoped, tag = 'input window, operand 0, single buffered']
    #allocation3 [shape = 's32[1]{0}', space=sflag, size = 0x4, scoped, tag = 'scoped memory for tpu_custom_call.1']
    #allocation4 [shape = 's32[1]{0}', space=sflag, size = 0x4, scoped, tag = 'scoped memory for tpu_custom_call.1']
    #allocation5 [shape = 'u8[16384]{0}', space=vmem, size = 0x4000, scoped, tag = 'input window, operand 1, single buffered']
    #allocation6 [shape = 's32[1]{0}', space=sflag, size = 0x4, scoped, tag = 'scoped memory for tpu_custom_call.1']
    #allocation7 [shape = 'u8[4096]{0}', space=vmem, size = 0x1000, scoped, tag = 'input window, operand 2, single buffered']
    #allocation8 [shape = 'u8[16384]{0}', space=vmem, size = 0x4000, scoped, tag = 'output window, operand 0, single buffered']
    %8 = vsyncpa [#allocation3], 0
    %9 = vsyncpa [#allocation6], 0
    %10 = vsyncpa [#allocation4], 0
    // Predicated region
    $region2: #{tpu_custom_call.1} parent=1 // pred_check
      _
    $region3: #{tpu_custom_call.1} parent=1 // pred_check_branch
      %12 = sbr.rel (0) target = $region5
    $region4: #{tpu_custom_call.1} parent=1 // pred_region
      %s14 = ssub.s32 512, 512
      %15 = vsyncadd [#allocation3], %s14
      %s16 = sshll.u32 [#allocation2], 4
      %s17 = int_to_ptr.vmem [resolvable:$true] %s16
      %22 = dma.hbm_to_vmem [thread:$0]  %s0, 512, %s17, [#allocation3], 128, 128, 8
    $region5: #{tpu_custom_call.1} parent=1 // pred_fallthru
      _
    // Predicated region
    $region6: #{tpu_custom_call.1} parent=1 // pred_check
      _
    $region7: #{tpu_custom_call.1} parent=1 // pred_check_branch
      %24 = sbr.rel (0) target = $region9
    $region8: #{tpu_custom_call.1} parent=1 // pred_region
      %s26 = ssub.s32 512, 512
      %27 = vsyncadd [#allocation6], %s26
      %s28 = sshll.u32 [#allocation5], 4
      %s29 = int_to_ptr.vmem [resolvable:$true] %s28
      %34 = dma.hbm_to_vmem [thread:$0]  %s1, 512, %s29, [#allocation6], 128, 128, 8
    $region9: #{tpu_custom_call.1} parent=1 // pred_fallthru
      _
    // Predicated region
    $region10: #{tpu_custom_call.1} parent=1 // pred_check
      _
    $region11: #{tpu_custom_call.1} parent=1 // pred_check_branch
      %36 = sbr.rel (0) target = $region13
    $region12: #{tpu_custom_call.1} parent=1 // pred_region
      %s38 = ssub.s32 128, 128
      %39 = vsyncadd [#allocation6], %s38
      %s40 = sshll.u32 [#allocation7], 4
      %s41 = int_to_ptr.vmem [resolvable:$true] %s40
      %46 = dma.hbm_to_vmem [thread:$0]  %s2, 128, %s41, [#allocation6], 64, 64, 4
    $region13: #{tpu_custom_call.1} parent=1 // pred_fallthru
      _
    // Predicated region
    $region14: #{tpu_custom_call.1} parent=1 // pred_check
      _
    $region15: #{tpu_custom_call.1} parent=1 // pred_check_branch
      %48 = sbr.rel (0) target = $region17
    $region16: #{tpu_custom_call.1} parent=1 // pred_region
      %49 = dma.done [#allocation3], 512
    $region17: #{tpu_custom_call.1} parent=1 // pred_fallthru
      _
    // Predicated region
    $region18: #{tpu_custom_call.1} parent=1 // pred_check
      _
    $region19: #{tpu_custom_call.1} parent=1 // pred_check_branch
      %51 = sbr.rel (0) target = $region21
    $region20: #{tpu_custom_call.1} parent=1 // pred_region
      %52 = dma.done [#allocation6], 512
    $region21: #{tpu_custom_call.1} parent=1 // pred_fallthru
      _
    // Predicated region
    $region22: #{tpu_custom_call.1} parent=1 // pred_check
      _
    $region23: #{tpu_custom_call.1} parent=1 // pred_check_branch
      %54 = sbr.rel (0) target = $region25
    $region24: #{tpu_custom_call.1} parent=1 // pred_region
      %55 = dma.done [#allocation6], 128
    $region25: #{tpu_custom_call.1} parent=1 // pred_fallthru
      _
    %v57 = vld [vmem:[#allocation2] sm:$0xff]
    %v58 = vld [vmem:[#allocation2 + $0x8] sm:$0xff]
    %v59 = vld [vmem:[#allocation2 + $0x10] sm:$0xff]
    %v60 = vld [vmem:[#allocation2 + $0x18] sm:$0xff]
    %v61 = vld [vmem:[#allocation5] sm:$0xff]
    %v62 = vld [vmem:[#allocation5 + $0x8] sm:$0xff]
    %v63 = vld [vmem:[#allocation5 + $0x10] sm:$0xff]
    %v64 = vld [vmem:[#allocation5 + $0x18] sm:$0xff]
    %v65 = vld [vmem:[#allocation7] sm:$0xf]
    %v66 = vld [vmem:[#allocation7 + $0x4] sm:$0xf]
    %vm67 = vcmask 130048
    %v68 = vsel %vm67, %v57, 0.0
    %69 = vadd.xlane.f32.xlu0 %v68
    %v70 = vpop.xlane.xlu0 %69
    %v71 = vsel %vm67, %v58, 0.0
    %72 = vadd.xlane.f32.xlu0 %v71
    %v73 = vpop.xlane.xlu0 %72
    %v74 = vsel %vm67, %v59, 0.0
    %75 = vadd.xlane.f32.xlu0 %v74
    %v76 = vpop.xlane.xlu0 %75
    %v77 = vsel %vm67, %v60, 0.0
    %78 = vadd.xlane.f32.xlu0 %v77
    %v79 = vpop.xlane.xlu0 %78
    %v80 = vadd.f32 %v70, 1.0
    %v81 = vadd.f32 %v73, 1.0
    %v82 = vadd.f32 %v76, 1.0
    %v83 = vadd.f32 %v79, 1.0
    %v84 = vrsqrt.pop %v80
    %v85 = vrsqrt.pop %v81
    %v86 = vrsqrt.pop %v82
    %v87 = vrsqrt.pop %v83
    %v88 = vmul.f32 %v84, %v61
    %v89 = vmul.f32 %v85, %v62
    %v90 = vmul.f32 %v86, %v63
    %v91 = vmul.f32 %v87, %v64
    %v92 = vpack.c.bf16 %v58, %v57
    %v93 = vpack.c.bf16 %v60, %v59
    %v94 = vpack.c.bf16 %v89, %v88
    %v95 = vpack.c.bf16 %v91, %v90
    %v97 = vsel %vm67, %v92, 0
    %99 = vmatprep.subr.bf16.mxu0 0
    %100 = vmatpush1.bf16.msra.mxu0 %v94
    %101 = vmatprep.subr.bf16.mxu0 0
    %102 = vmatpush1.bf16.msra.mxu0 0
    %103 = vmatprep.subr.bf16.mxu0 0
    %104 = vmatpush1.bf16.msra.mxu0 0
    %105 = vmatprep.subr.bf16.mxu0 0
    %106 = vmatpush1.bf16.msra.mxu0 0
    %107 = vmatprep.subr.bf16.mxu0 0
    %108 = vmatpush1.bf16.msra.mxu0 0
    %109 = vmatprep.subr.bf16.mxu0 0
    %110 = vmatpush1.bf16.msra.mxu0 0
    %111 = vmatprep.subr.bf16.mxu0 0
    %112 = vmatpush1.bf16.msra.mxu0 0
    %113 = vmatprep.subr.bf16.mxu0 0
    %114 = vmatpush1.bf16.msra.mxu0 0
    %115 = vmatprep.subr.bf16.mxu0 0
    %116 = vmatpush1.bf16.msra.mxu0 0
    %117 = vmatprep.subr.bf16.mxu0 0
    %118 = vmatpush1.bf16.msra.mxu0 0
    %119 = vmatprep.subr.bf16.mxu0 0
    %120 = vmatpush1.bf16.msra.mxu0 0
    %121 = vmatprep.subr.bf16.mxu0 0
    %122 = vmatpush1.bf16.msra.mxu0 0
    %123 = vmatprep.subr.bf16.mxu0 0
    %124 = vmatpush1.bf16.msra.mxu0 0
    %125 = vmatprep.subr.bf16.mxu0 0
    %126 = vmatpush1.bf16.msra.mxu0 0
    %127 = vmatprep.subr.bf16.mxu0 0
    %128 = vmatpush1.bf16.msra.mxu0 0
    %129 = vmatprep.subr.bf16.mxu0 0
    %130 = vmatpush1.bf16.msra.mxu0 0
    %131 = vmatprep.mubr.bf16.mxu0 0
    %132 = vmatmul.mubr.bf16.gmra.mrb[0].mxu0 %v97
    %v133 = vpop.f32.mrb[0].mxu0
    %v134 = vadd.f32 %v88, %v133
    %v135 = vpop.f32.mrb[0].mxu0
    %v136 = vpop.f32.mrb[0].mxu0
    %v137 = vadd.f32 %v89, %v136
    %v138 = vpop.f32.mrb[0].mxu0
    %139 = vdwg.mxu0
    %v141 = vsel %vm67, %v93, 0
    %143 = vmatprep.subr.bf16.mxu0 0
    %144 = vmatpush1.bf16.msra.mxu0 %v95
    %145 = vmatprep.subr.bf16.mxu0 0
    %146 = vmatpush1.bf16.msra.mxu0 0
    %147 = vmatprep.subr.bf16.mxu0 0
    %148 = vmatpush1.bf16.msra.mxu0 0
    %149 = vmatprep.subr.bf16.mxu0 0
    %150 = vmatpush1.bf16.msra.mxu0 0
    %151 = vmatprep.subr.bf16.mxu0 0
    %152 = vmatpush1.bf16.msra.mxu0 0
    %153 = vmatprep.subr.bf16.mxu0 0
    %154 = vmatpush1.bf16.msra.mxu0 0
    %155 = vmatprep.subr.bf16.mxu0 0
    %156 = vmatpush1.bf16.msra.mxu0 0
    %157 = vmatprep.subr.bf16.mxu0 0
    %158 = vmatpush1.bf16.msra.mxu0 0
    %159 = vmatprep.subr.bf16.mxu0 0
    %160 = vmatpush1.bf16.msra.mxu0 0
    %161 = vmatprep.subr.bf16.mxu0 0
    %162 = vmatpush1.bf16.msra.mxu0 0
    %163 = vmatprep.subr.bf16.mxu0 0
    %164 = vmatpush1.bf16.msra.mxu0 0
    %165 = vmatprep.subr.bf16.mxu0 0
    %166 = vmatpush1.bf16.msra.mxu0 0
    %167 = vmatprep.subr.bf16.mxu0 0
    %168 = vmatpush1.bf16.msra.mxu0 0
    %169 = vmatprep.subr.bf16.mxu0 0
    %170 = vmatpush1.bf16.msra.mxu0 0
    %171 = vmatprep.subr.bf16.mxu0 0
    %172 = vmatpush1.bf16.msra.mxu0 0
    %173 = vmatprep.subr.bf16.mxu0 0
    %174 = vmatpush1.bf16.msra.mxu0 0
    %175 = vmatprep.mubr.bf16.mxu0 0
    %176 = vmatmul.mubr.bf16.gmra.mrb[0].mxu0 %v141
    %v177 = vpop.f32.mrb[0].mxu0
    %v178 = vadd.f32 %v90, %v177
    %v179 = vpop.f32.mrb[0].mxu0
    %v180 = vpop.f32.mrb[0].mxu0
    %v181 = vadd.f32 %v91, %v180
    %v182 = vpop.f32.mrb[0].mxu0
    %183 = vdwg.mxu0
    %v184 = vmul.f32 %v84, %v134
    %v185 = vmul.f32 %v85, %v137
    %v186 = vmul.f32 %v86, %v178
    %v187 = vmul.f32 %v87, %v181
    %v188 = vpack.c.bf16 %v185, %v184
    %v189 = vpack.c.bf16 %v187, %v186
    %v192 = vunpack.c.l.b16 %v65
    %v193 = vunpack.c.l.b16 %v66
    %v194 = vpack.c.b16 %v193, %v192
    %v197 = vsel %vm67, %v188, 0
    %v200 = vsel %vm67, %v189, 0
    %202 = vmatprep.subr.bf16.mxu0 0
    %203 = vmatpush1.bf16.msra.mxu0 %v194
    %204 = vmatprep.subr.bf16.mxu0 0
    %205 = vmatpush1.bf16.msra.mxu0 0
    %206 = vmatprep.subr.bf16.mxu0 0
    %207 = vmatpush1.bf16.msra.mxu0 0
    %208 = vmatprep.subr.bf16.mxu0 0
    %209 = vmatpush1.bf16.msra.mxu0 0
    %210 = vmatprep.subr.bf16.mxu0 0
    %211 = vmatpush1.bf16.msra.mxu0 0
    %212 = vmatprep.subr.bf16.mxu0 0
    %213 = vmatpush1.bf16.msra.mxu0 0
    %214 = vmatprep.subr.bf16.mxu0 0
    %215 = vmatpush1.bf16.msra.mxu0 0
    %216 = vmatprep.subr.bf16.mxu0 0
    %217 = vmatpush1.bf16.msra.mxu0 0
    %218 = vmatprep.subr.bf16.mxu0 0
    %219 = vmatpush1.bf16.msra.mxu0 0
    %220 = vmatprep.subr.bf16.mxu0 0
    %221 = vmatpush1.bf16.msra.mxu0 0
    %222 = vmatprep.subr.bf16.mxu0 0
    %223 = vmatpush1.bf16.msra.mxu0 0
    %224 = vmatprep.subr.bf16.mxu0 0
    %225 = vmatpush1.bf16.msra.mxu0 0
    %226 = vmatprep.subr.bf16.mxu0 0
    %227 = vmatpush1.bf16.msra.mxu0 0
    %228 = vmatprep.subr.bf16.mxu0 0
    %229 = vmatpush1.bf16.msra.mxu0 0
    %230 = vmatprep.subr.bf16.mxu0 0
    %231 = vmatpush1.bf16.msra.mxu0 0
    %232 = vmatprep.subr.bf16.mxu0 0
    %233 = vmatpush1.bf16.msra.mxu0 0
    %234 = vmatprep.mubr.bf16.mxu0 0
    %235 = vmatmul.mubr.bf16.gmra.mrb[0].mxu0 %v197
    %v236 = vpop.f32.mrb[0].mxu0
    %v237 = vadd.f32 0.0, %v236
    %v238 = vpop.f32.mrb[0].mxu0
    %v239 = vpop.f32.mrb[0].mxu0
    %v240 = vadd.f32 0.0, %v239
    %v241 = vpop.f32.mrb[0].mxu0
    %242 = vmatprep.mubr.bf16.mxu0 0
    %243 = vmatmul.mubr.bf16.gmra.mrb[0].mxu0 %v200
    %v244 = vpop.f32.mrb[0].mxu0
    %v245 = vadd.f32 0.0, %v244
    %v246 = vpop.f32.mrb[0].mxu0
    %v247 = vpop.f32.mrb[0].mxu0
    %v248 = vadd.f32 0.0, %v247
    %v249 = vpop.f32.mrb[0].mxu0
    %250 = vdwg.mxu0
    %251 = vst [vmem:[#allocation8] sm:$0xff] %v237
    %252 = vst [vmem:[#allocation8 + $0x8] sm:$0xff] %v240
    %253 = vst [vmem:[#allocation8 + $0x10] sm:$0xff] %v245
    %254 = vst [vmem:[#allocation8 + $0x18] sm:$0xff] %v248
    // Predicated region
    $region26: #{tpu_custom_call.1} parent=1 // pred_check
      _
    $region27: #{tpu_custom_call.1} parent=1 // pred_check_branch
      %256 = sbr.rel (0) target = $region29
    $region28: #{tpu_custom_call.1} parent=1 // pred_region
      %s258 = ssub.s32 512, 512
      %259 = vsyncadd [#allocation4], %s258
      %s260 = sshll.u32 [#allocation8], 4
      %s261 = int_to_ptr.vmem [resolvable:$true] %s260
      %266 = dma.vmem_to_hbm [thread:$0]  %s261, 512, %s3, [#allocation4], 128, 128, 8
    $region29: #{tpu_custom_call.1} parent=1 // pred_fallthru
      _
    // Predicated region
    $region30: #{tpu_custom_call.1} parent=1 // pred_check
      _
    $region31: #{tpu_custom_call.1} parent=1 // pred_check_branch
      %268 = sbr.rel (0) target = $region33
    $region32: #{tpu_custom_call.1} parent=1 // pred_region
      %269 = dma.done [#allocation4], 512
    $region33: #{tpu_custom_call.1} parent=1 // pred_fallthru
      _
    %270 = vsyncpa [#allocation3], 1
    %271 = vsyncpa [#allocation6], 1
    %272 = vsyncpa [#allocation4], 1

</llo_original>
